<compile_context>
chip_gen: v7x
topology: tpu7x:2x2x1
jax: 0.10.0
libtpu: 0.0.40
codegen_flags: <defaults>
</compile_context>

<pallas_src>
import functools

import jax
import jax.numpy as jnp
from jax import lax
from jax.experimental import pallas as pl
from jax.experimental.pallas import tpu as pltpu


def _attn_proj_kernel(q_ref, k_ref, v_ref, w_ref, b_ref, o_ref, *, scale):
    # Whole problem handled in a single invocation; every ref is the full
    # array resident in VMEM.
    B, S, D = q_ref.shape

    w = w_ref[...].astype(jnp.bfloat16)       # (D, D_pad) — loaded once
    bias = b_ref[...]                         # (1, D_pad), f32

    for bi in range(B):                       # B=2: trivial static unroll
        q = q_ref[bi].astype(jnp.bfloat16)    # (S, D)
        k = k_ref[bi].astype(jnp.bfloat16)    # (S, D)
        v = v_ref[bi].astype(jnp.bfloat16)    # (S, D)

        # Scores: contract over D without materializing k.T (MXU trans_b).
        s = lax.dot_general(
            q, k,
            dimension_numbers=(((1,), (1,)), ((), ())),
            preferred_element_type=jnp.float32) * scale      # (S, S) f32

        # Numerically-stable softmax along the key axis (f32).
        m = jnp.max(s, axis=-1, keepdims=True)
        p = jnp.exp(s - m)
        denom = jnp.sum(p, axis=-1, keepdims=True)
        p = p * pl.reciprocal(denom, approx=True)            # EUP vrcp slot

        # Attention output: (S,S) @ (S,D) -> (S, D), f32 accumulation.
        o = jnp.dot(p.astype(jnp.bfloat16), v,
                    preferred_element_type=jnp.float32)

        # Output projection: (S,D) @ (D,D_pad) + bias -> (S, D_pad).
        out = jnp.dot(o.astype(jnp.bfloat16), w,
                      preferred_element_type=jnp.float32) + bias

        # Full 128-lane, unmasked store for this batch's slab.
        o_ref[bi] = out.astype(o_ref.dtype)


def _attention_projection(q, k, v, w_pad, b_pad):
    """Single-step Pallas call: everything lives in VMEM, no grid loop."""
    B, S, D = q.shape
    d_pad = w_pad.shape[1]
    scale = 1.0 / (float(D) ** 0.5)           # scale uses the *unpadded* D

    kernel = functools.partial(_attn_proj_kernel, scale=scale)
    vmem = pl.BlockSpec(memory_space=pltpu.MemorySpace.VMEM)

    return pl.pallas_call(
        kernel,
        out_shape=jax.ShapeDtypeStruct((B, S, d_pad), jnp.float32),
        in_specs=[vmem, vmem, vmem, vmem, vmem],
        out_specs=vmem,
    )(q, k, v, w_pad, b_pad)


@functools.partial(jax.jit, static_argnames=("d_model",))
def _forward_impl(q, k, v, w_pad, b_pad, *, d_model):
    out_pad = _attention_projection(q, k, v, w_pad, b_pad)
    return out_pad[..., :d_model]             # strip the lane padding


class SelfContainedModelP3:
    """JAX analogue of the PyTorch wrapper: forward() takes no args and
    evaluates model(data[0], data[1], data[2])."""

    def __init__(self, params, data):
        w_out, b_out = params
        assert len(data) == 3
        self.data = data
        self.d_model = w_out.shape[1]
        # Pad the projection weight/bias ONCE at construction time so the
        # kernel's output store is lane-dense (last dim multiple of 128).
        d_pad = ((self.d_model + 127) // 128) * 128
        self.w_pad = jnp.pad(w_out, ((0, 0), (0, d_pad - self.d_model)))
        self.b_pad = jnp.pad(b_out, ((0, 0), (0, d_pad - self.d_model)))

    def forward(self):
        q, k, v = self.data
        return _forward_impl(q, k, v, self.w_pad, self.b_pad,
                             d_model=self.d_model)

    __call__ = forward


def _reference(q, k, v, w_out, b_out):
    D = q.shape[-1]
    s = jnp.einsum("bqd,bkd->bqk", q, k) / (D ** 0.5)
    p = jax.nn.softmax(s, axis=-1)
    o = jnp.einsum("bqk,bkd->bqd", p, v)
    return jnp.einsum("bqd,de->bqe", o, w_out) + b_out[None, :, :]


if __name__ == "__main__":
    B, S, D = 2, 8, 32

    key = jax.random.PRNGKey(0)
    kq, kk, kv, kw, kb = jax.random.split(key, 5)

    # Bundled data (the "self-contained" inputs).
    q = jax.random.normal(kq, (B, S, D), dtype=jnp.float32)
    k = jax.random.normal(kk, (B, S, D), dtype=jnp.float32)
    v = jax.random.normal(kv, (B, S, D), dtype=jnp.float32)

    # Deterministic parameters of the inner model (output projection).
    w_out = jax.random.normal(kw, (D, D), dtype=jnp.float32) * (1.0 / (D ** 0.5))
    b_out = jax.random.normal(kb, (1, D), dtype=jnp.float32) * 0.1

    model = SelfContainedModelP3((w_out, b_out), (q, k, v))

    out = jax.block_until_ready(model())      # forward() takes no arguments

    ref = _reference(q, k, v, w_out, b_out)
    assert out.shape == (B, S, D)
    # Tolerance budget: bf16 MXU operands (f32 accumulation) across three
    # chained matmuls plus the approx EUP reciprocal in the softmax give
    # worst-element errors of a few 1e-2 at O(1) output magnitudes; any
    # structural bug (wrong contraction, missing softmax) differs by O(1).
    assert jnp.allclose(out, ref, atol=1e-1, rtol=2e-2), "mismatch vs reference"

    print("KERNEL_OK")
</pallas_src>

<mosaic_0001>
module attributes {stable_mosaic.version = 11 : i64} {
  func.func @_attn_proj_kernel(%arg0: memref<2x8x32xf32, #tpu.memory_space<vmem>>, %arg1: memref<2x8x32xf32, #tpu.memory_space<vmem>>, %arg2: memref<2x8x32xf32, #tpu.memory_space<vmem>>, %arg3: memref<32x128xf32, #tpu.memory_space<vmem>>, %arg4: memref<1x128xf32, #tpu.memory_space<vmem>>, %arg5: memref<2x8x128xf32, #tpu.memory_space<vmem>>) attributes {dimension_semantics = [], scalar_prefetch = 0 : i64, scratch_operands = 0 : i64, tpu.core_type = #tpu.core_type<tc>} {
    %c0 = arith.constant 0 : index
    %c0_0 = arith.constant 0 : index
    %0 = vector.load %arg3[%c0, %c0_0] : memref<32x128xf32, #tpu.memory_space<vmem>>, vector<32x128xf32>
    %1 = arith.truncf %0 : vector<32x128xf32> to vector<32x128xbf16>
    %c0_1 = arith.constant 0 : index
    %c0_2 = arith.constant 0 : index
    %2 = vector.load %arg4[%c0_1, %c0_2] : memref<1x128xf32, #tpu.memory_space<vmem>>, vector<1x128xf32>
    %c0_3 = arith.constant 0 : index
    %c0_4 = arith.constant 0 : index
    %c0_5 = arith.constant 0 : index
    %3 = vector.load %arg0[%c0_3, %c0_4, %c0_5] : memref<2x8x32xf32, #tpu.memory_space<vmem>>, vector<1x8x32xf32>
    %4 = vector.shape_cast %3 : vector<1x8x32xf32> to vector<8x32xf32>
    %5 = arith.truncf %4 : vector<8x32xf32> to vector<8x32xbf16>
    %c0_6 = arith.constant 0 : index
    %c0_7 = arith.constant 0 : index
    %c0_8 = arith.constant 0 : index
    %6 = vector.load %arg1[%c0_6, %c0_7, %c0_8] : memref<2x8x32xf32, #tpu.memory_space<vmem>>, vector<1x8x32xf32>
    %7 = vector.shape_cast %6 : vector<1x8x32xf32> to vector<8x32xf32>
    %8 = arith.truncf %7 : vector<8x32xf32> to vector<8x32xbf16>
    %c0_9 = arith.constant 0 : index
    %c0_10 = arith.constant 0 : index
    %c0_11 = arith.constant 0 : index
    %9 = vector.load %arg2[%c0_9, %c0_10, %c0_11] : memref<2x8x32xf32, #tpu.memory_space<vmem>>, vector<1x8x32xf32>
    %10 = vector.shape_cast %9 : vector<1x8x32xf32> to vector<8x32xf32>
    %11 = arith.truncf %10 : vector<8x32xf32> to vector<8x32xbf16>
    %cst = arith.constant dense<0.000000e+00> : vector<8x8xf32>
    %12 = tpu.matmul %5, %8, %cst {dimension_numbers = #tpu.dot_dimension_numbers<[1], [1], [0], [0], [0, 0, 1, 0], [], []>} : vector<8x32xbf16>, vector<8x32xbf16>, vector<8x8xf32> -> vector<8x8xf32>
    %cst_12 = arith.constant 0.176776692 : f32
    %13 = vector.broadcast %cst_12 : f32 to vector<8x8xf32>
    %14 = arith.mulf %12, %13 : vector<8x8xf32>
    %cst_13 = arith.constant dense<0xFF800000> : vector<8xf32>
    %15 = vector.multi_reduction <maximumf>, %14, %cst_13 [1] : vector<8x8xf32> to vector<8xf32>
    %16 = vector.shape_cast %15 : vector<8xf32> to vector<8x1xf32>
    %17 = vector.broadcast %16 : vector<8x1xf32> to vector<8x8xf32>
    %18 = arith.subf %14, %17 : vector<8x8xf32>
    %19 = math.exp %18 : vector<8x8xf32>
    %cst_14 = arith.constant dense<0.000000e+00> : vector<8xf32>
    %20 = vector.multi_reduction <add>, %19, %cst_14 [1] : vector<8x8xf32> to vector<8xf32>
    %21 = vector.shape_cast %20 : vector<8xf32> to vector<8x1xf32>
    %22 = tpu.reciprocal %21 {approx = true} : vector<8x1xf32> -> vector<8x1xf32>
    %23 = vector.broadcast %22 : vector<8x1xf32> to vector<8x8xf32>
    %24 = arith.mulf %19, %23 : vector<8x8xf32>
    %25 = arith.truncf %24 : vector<8x8xf32> to vector<8x8xbf16>
    %cst_15 = arith.constant dense<0.000000e+00> : vector<8x32xf32>
    %26 = tpu.matmul %25, %11, %cst_15 {dimension_numbers = #tpu.dot_dimension_numbers<[1], [0], [0], [1], [0, 0, 1, 1], [], []>} : vector<8x8xbf16>, vector<8x32xbf16>, vector<8x32xf32> -> vector<8x32xf32>
    %27 = arith.truncf %26 : vector<8x32xf32> to vector<8x32xbf16>
    %cst_16 = arith.constant dense<0.000000e+00> : vector<8x128xf32>
    %28 = tpu.matmul %27, %1, %cst_16 {dimension_numbers = #tpu.dot_dimension_numbers<[1], [0], [0], [1], [0, 0, 1, 1], [], []>} : vector<8x32xbf16>, vector<32x128xbf16>, vector<8x128xf32> -> vector<8x128xf32>
    %29 = vector.broadcast %2 : vector<1x128xf32> to vector<8x128xf32>
    %30 = arith.addf %28, %29 : vector<8x128xf32>
    %c0_17 = arith.constant 0 : index
    %c0_18 = arith.constant 0 : index
    %c0_19 = arith.constant 0 : index
    %31 = vector.load %arg5[%c0_17, %c0_18, %c0_19] : memref<2x8x128xf32, #tpu.memory_space<vmem>>, vector<1x8x128xf32>
    %32 = vector.shape_cast %31 : vector<1x8x128xf32> to vector<8x128xf32>
    %33 = vector.shape_cast %30 : vector<8x128xf32> to vector<1x8x128xf32>
    tpu.vector_store %arg5[%c0_17, %c0_18, %c0_19], %33 {strides = array<i32>} : memref<2x8x128xf32, #tpu.memory_space<vmem>>, vector<1x8x128xf32>,
    %c1 = arith.constant 1 : index
    %c0_20 = arith.constant 0 : index
    %c0_21 = arith.constant 0 : index
    %34 = vector.load %arg0[%c1, %c0_20, %c0_21] : memref<2x8x32xf32, #tpu.memory_space<vmem>>, vector<1x8x32xf32>
    %35 = vector.shape_cast %34 : vector<1x8x32xf32> to vector<8x32xf32>
    %36 = arith.truncf %35 : vector<8x32xf32> to vector<8x32xbf16>
    %c1_22 = arith.constant 1 : index
    %c0_23 = arith.constant 0 : index
    %c0_24 = arith.constant 0 : index
    %37 = vector.load %arg1[%c1_22, %c0_23, %c0_24] : memref<2x8x32xf32, #tpu.memory_space<vmem>>, vector<1x8x32xf32>
    %38 = vector.shape_cast %37 : vector<1x8x32xf32> to vector<8x32xf32>
    %39 = arith.truncf %38 : vector<8x32xf32> to vector<8x32xbf16>
    %c1_25 = arith.constant 1 : index
    %c0_26 = arith.constant 0 : index
    %c0_27 = arith.constant 0 : index
    %40 = vector.load %arg2[%c1_25, %c0_26, %c0_27] : memref<2x8x32xf32, #tpu.memory_space<vmem>>, vector<1x8x32xf32>
    %41 = vector.shape_cast %40 : vector<1x8x32xf32> to vector<8x32xf32>
    %42 = arith.truncf %41 : vector<8x32xf32> to vector<8x32xbf16>
    %cst_28 = arith.constant dense<0.000000e+00> : vector<8x8xf32>
    %43 = tpu.matmul %36, %39, %cst_28 {dimension_numbers = #tpu.dot_dimension_numbers<[1], [1], [0], [0], [0, 0, 1, 0], [], []>} : vector<8x32xbf16>, vector<8x32xbf16>, vector<8x8xf32> -> vector<8x8xf32>
    %cst_29 = arith.constant 0.176776692 : f32
    %44 = vector.broadcast %cst_29 : f32 to vector<8x8xf32>
    %45 = arith.mulf %43, %44 : vector<8x8xf32>
    %cst_30 = arith.constant dense<0xFF800000> : vector<8xf32>
    %46 = vector.multi_reduction <maximumf>, %45, %cst_30 [1] : vector<8x8xf32> to vector<8xf32>
    %47 = vector.shape_cast %46 : vector<8xf32> to vector<8x1xf32>
    %48 = vector.broadcast %47 : vector<8x1xf32> to vector<8x8xf32>
    %49 = arith.subf %45, %48 : vector<8x8xf32>
    %50 = math.exp %49 : vector<8x8xf32>
    %cst_31 = arith.constant dense<0.000000e+00> : vector<8xf32>
    %51 = vector.multi_reduction <add>, %50, %cst_31 [1] : vector<8x8xf32> to vector<8xf32>
    %52 = vector.shape_cast %51 : vector<8xf32> to vector<8x1xf32>
    %53 = tpu.reciprocal %52 {approx = true} : vector<8x1xf32> -> vector<8x1xf32>
    %54 = vector.broadcast %53 : vector<8x1xf32> to vector<8x8xf32>
    %55 = arith.mulf %50, %54 : vector<8x8xf32>
    %56 = arith.truncf %55 : vector<8x8xf32> to vector<8x8xbf16>
    %cst_32 = arith.constant dense<0.000000e+00> : vector<8x32xf32>
    %57 = tpu.matmul %56, %42, %cst_32 {dimension_numbers = #tpu.dot_dimension_numbers<[1], [0], [0], [1], [0, 0, 1, 1], [], []>} : vector<8x8xbf16>, vector<8x32xbf16>, vector<8x32xf32> -> vector<8x32xf32>
    %58 = arith.truncf %57 : vector<8x32xf32> to vector<8x32xbf16>
    %cst_33 = arith.constant dense<0.000000e+00> : vector<8x128xf32>
    %59 = tpu.matmul %58, %1, %cst_33 {dimension_numbers = #tpu.dot_dimension_numbers<[1], [0], [0], [1], [0, 0, 1, 1], [], []>} : vector<8x32xbf16>, vector<32x128xbf16>, vector<8x128xf32> -> vector<8x128xf32>
    %60 = vector.broadcast %2 : vector<1x128xf32> to vector<8x128xf32>
    %61 = arith.addf %59, %60 : vector<8x128xf32>
    %c1_34 = arith.constant 1 : index
    %c0_35 = arith.constant 0 : index
    %c0_36 = arith.constant 0 : index
    %62 = vector.load %arg5[%c1_34, %c0_35, %c0_36] : memref<2x8x128xf32, #tpu.memory_space<vmem>>, vector<1x8x128xf32>
    %63 = vector.shape_cast %62 : vector<1x8x128xf32> to vector<8x128xf32>
    %64 = vector.shape_cast %61 : vector<8x128xf32> to vector<1x8x128xf32>
    tpu.vector_store %arg5[%c1_34, %c0_35, %c0_36], %64 {strides = array<i32>} : memref<2x8x128xf32, #tpu.memory_space<vmem>>, vector<1x8x128xf32>,
    return
  }
}

</mosaic_0001>

<llo_original>
// kernel: _forward_impl.1
$region0: #{_forward_impl.1}
  #allocation0 [shape = 'u32[]', space=smem, size = 0x4, offset = 0x4, fixed_abs, tag = 'smem constant byte address 0x4 - core index']
  #allocation1 [shape = 'u32[144,128]{1,0:T(1,128)}', space=vmem, size = 0x12000, scoped, tag = 'internal scratch']
  %s0 = inlined_call_operand.hbm [shape: f32[2,8,32], index: 0, kind: input, shape index: {}]
  %s1 = inlined_call_operand.hbm [shape: f32[2,8,32], index: 1, kind: input, shape index: {}]
  %s2 = inlined_call_operand.hbm [shape: f32[2,8,32], index: 2, kind: input, shape index: {}]
  %s3 = inlined_call_operand.hbm [shape: f32[32,128], index: 3, kind: input, shape index: {}]
  %s4 = inlined_call_operand.vmem [shape: f32[1,128], index: 4, kind: input, shape index: {}]
  %s5 = inlined_call_operand.hbm [shape: f32[2,8,128], index: 5, kind: output, shape index: {}]
  %s6 = sld [smem:[#allocation0]]
  $region46: #{_forward_impl.1} parent=0
    _
  %s8 = ssub.s32 1, %s6
  %s9 = scalar_select 0, %s8, %s6
  $region1: #{_forward_impl.1} parent=0
    #allocation2 [shape = 'u8[8192]{0}', space=vmem, size = 0x2000, scoped, tag = 'input window, operand 0, single buffered']
    #allocation3 [shape = 's32[1]{0}', space=sflag, size = 0x4, scoped, tag = 'scoped memory for _forward_impl.1']
    #allocation4 [shape = 's32[1]{0}', space=sflag, size = 0x4, scoped, tag = 'scoped memory for _forward_impl.1']
    #allocation5 [shape = 'u8[8192]{0}', space=vmem, size = 0x2000, scoped, tag = 'input window, operand 1, single buffered']
    #allocation6 [shape = 's32[1]{0}', space=sflag, size = 0x4, scoped, tag = 'scoped memory for _forward_impl.1']
    #allocation7 [shape = 'u8[8192]{0}', space=vmem, size = 0x2000, scoped, tag = 'input window, operand 2, single buffered']
    #allocation8 [shape = 'u8[16384]{0}', space=vmem, size = 0x4000, scoped, tag = 'input window, operand 3, single buffered']
    #allocation9 [shape = 's32[1]{0}', space=sflag, size = 0x4, scoped, tag = 'scoped memory for _forward_impl.1']
    #allocation10 [shape = 'u8[8192]{0}', space=vmem, size = 0x2000, scoped, tag = 'output window, operand 0, single buffered']
    %10 = vsyncpa [#allocation3], 0
    %11 = vsyncpa [#allocation6], 0
    %12 = vsyncpa [#allocation9], 0
    %13 = vsyncpa [#allocation4], 0
    // Predicated region
    $region2: #{_forward_impl.1} parent=1 // pred_check
      _
    $region3: #{_forward_impl.1} parent=1 // pred_check_branch
      %15 = sbr.rel (0) target = $region5
    $region4: #{_forward_impl.1} parent=1 // pred_region
      %s17 = ssub.s32 256, 256
      %18 = vsyncadd [#allocation3], %s17
      %s19 = sshll.u32 [#allocation2], 4
      %s20 = int_to_ptr.vmem [resolvable:$true] %s19
      %25 = dma.hbm_to_vmem [thread:$0]  %s0, 256, %s20, [#allocation3], 128, 128, 8
    $region5: #{_forward_impl.1} parent=1 // pred_fallthru
      _
    // Predicated region
    $region6: #{_forward_impl.1} parent=1 // pred_check
      _
    $region7: #{_forward_impl.1} parent=1 // pred_check_branch
      %27 = sbr.rel (0) target = $region9
    $region8: #{_forward_impl.1} parent=1 // pred_region
      %s29 = ssub.s32 256, 256
      %30 = vsyncadd [#allocation6], %s29
      %s31 = sshll.u32 [#allocation5], 4
      %s32 = int_to_ptr.vmem [resolvable:$true] %s31
      %37 = dma.hbm_to_vmem [thread:$0]  %s1, 256, %s32, [#allocation6], 128, 128, 8
    $region9: #{_forward_impl.1} parent=1 // pred_fallthru
      _
    // Predicated region
    $region10: #{_forward_impl.1} parent=1 // pred_check
      _
    $region11: #{_forward_impl.1} parent=1 // pred_check_branch
      %39 = sbr.rel (0) target = $region13
    $region12: #{_forward_impl.1} parent=1 // pred_region
      %s41 = ssub.s32 256, 256
      %42 = vsyncadd [#allocation6], %s41
      %s43 = sshll.u32 [#allocation7], 4
      %s44 = int_to_ptr.vmem [resolvable:$true] %s43
      %49 = dma.hbm_to_vmem [thread:$0]  %s2, 256, %s44, [#allocation6], 128, 128, 8
    $region13: #{_forward_impl.1} parent=1 // pred_fallthru
      _
    // Predicated region
    $region14: #{_forward_impl.1} parent=1 // pred_check
      _
    $region15: #{_forward_impl.1} parent=1 // pred_check_branch
      %51 = sbr.rel (0) target = $region17
    $region16: #{_forward_impl.1} parent=1 // pred_region
      %s53 = ssub.s32 512, 512
      %54 = vsyncadd [#allocation9], %s53
      %s55 = sshll.u32 [#allocation8], 4
      %s56 = int_to_ptr.vmem [resolvable:$true] %s55
      %61 = dma.hbm_to_vmem [thread:$0]  %s3, 512, %s56, [#allocation9], 128, 128, 8
    $region17: #{_forward_impl.1} parent=1 // pred_fallthru
      _
    // Predicated region
    $region18: #{_forward_impl.1} parent=1 // pred_check
      _
    $region19: #{_forward_impl.1} parent=1 // pred_check_branch
      %63 = sbr.rel (0) target = $region21
    $region20: #{_forward_impl.1} parent=1 // pred_region
      _
    $region21: #{_forward_impl.1} parent=1 // pred_fallthru
      _
    // Predicated region
    $region22: #{_forward_impl.1} parent=1 // pred_check
      _
    $region23: #{_forward_impl.1} parent=1 // pred_check_branch
      %65 = sbr.rel (0) target = $region25
    $region24: #{_forward_impl.1} parent=1 // pred_region
      %66 = dma.done [#allocation3], 256
    $region25: #{_forward_impl.1} parent=1 // pred_fallthru
      _
    // Predicated region
    $region26: #{_forward_impl.1} parent=1 // pred_check
      _
    $region27: #{_forward_impl.1} parent=1 // pred_check_branch
      %68 = sbr.rel (0) target = $region29
    $region28: #{_forward_impl.1} parent=1 // pred_region
      %69 = dma.done [#allocation6], 256
    $region29: #{_forward_impl.1} parent=1 // pred_fallthru
      _
    // Predicated region
    $region30: #{_forward_impl.1} parent=1 // pred_check
      _
    $region31: #{_forward_impl.1} parent=1 // pred_check_branch
      %71 = sbr.rel (0) target = $region33
    $region32: #{_forward_impl.1} parent=1 // pred_region
      %72 = dma.done [#allocation6], 256
    $region33: #{_forward_impl.1} parent=1 // pred_fallthru
      _
    // Predicated region
    $region34: #{_forward_impl.1} parent=1 // pred_check
      _
    $region35: #{_forward_impl.1} parent=1 // pred_check_branch
      %74 = sbr.rel (0) target = $region37
    $region36: #{_forward_impl.1} parent=1 // pred_region
      %75 = dma.done [#allocation9], 512
    $region37: #{_forward_impl.1} parent=1 // pred_fallthru
      _
    %v77 = vld [vmem:[#allocation8] sm:$0xff]
    %v78 = vld [vmem:[#allocation8 + $0x8] sm:$0xff]
    %v79 = vld [vmem:[#allocation8 + $0x10] sm:$0xff]
    %v80 = vld [vmem:[#allocation8 + $0x18] sm:$0xff]
    %v81 = vpack.c.bf16 %v78, %v77
    %v82 = vpack.c.bf16 %v80, %v79
    %v83 = vld [vmem:[%s4] sm:$0x1]
    %v84 = vld [vmem:[#allocation2] sm:$0xff]
    %v85 = vpack.c.bf16 %v84, %v84
    %v86 = vld [vmem:[#allocation5] sm:$0xff]
    %v87 = vpack.c.bf16 %v86, %v86
    %v88 = vld [vmem:[#allocation7] sm:$0xff]
    %v89 = vpack.c.bf16 %v88, %v88
    %vm90 = vcmask 261120
    %v92 = vsel %vm90, %v85, 0
    %v95 = vsel %vm90, %v87, 0
    %97 = vmatprep.subr.bf16.mxu0 0
    %98 = vmatpush1.bf16.xpose.msra.mxu0 %v95
    %99 = vmatprep.subr.bf16.mxu0 0
    %100 = vmatpush1.bf16.xpose.msra.mxu0 0
    %101 = vmatprep.subr.bf16.mxu0 0
    %102 = vmatpush1.bf16.xpose.msra.mxu0 0
    %103 = vmatprep.subr.bf16.mxu0 0
    %104 = vmatpush1.bf16.xpose.msra.mxu0 0
    %105 = vmatprep.subr.bf16.mxu0 0
    %106 = vmatpush1.bf16.xpose.msra.mxu0 0
    %107 = vmatprep.subr.bf16.mxu0 0
    %108 = vmatpush1.bf16.xpose.msra.mxu0 0
    %109 = vmatprep.subr.bf16.mxu0 0
    %110 = vmatpush1.bf16.xpose.msra.mxu0 0
    %111 = vmatprep.subr.bf16.mxu0 0
    %112 = vmatpush1.bf16.xpose.msra.mxu0 0
    %113 = vmatprep.subr.bf16.mxu0 0
    %114 = vmatpush1.bf16.xpose.msra.mxu0 0
    %115 = vmatprep.subr.bf16.mxu0 0
    %116 = vmatpush1.bf16.xpose.msra.mxu0 0
    %117 = vmatprep.subr.bf16.mxu0 0
    %118 = vmatpush1.bf16.xpose.msra.mxu0 0
    %119 = vmatprep.subr.bf16.mxu0 0
    %120 = vmatpush1.bf16.xpose.msra.mxu0 0
    %121 = vmatprep.subr.bf16.mxu0 0
    %122 = vmatpush1.bf16.xpose.msra.mxu0 0
    %123 = vmatprep.subr.bf16.mxu0 0
    %124 = vmatpush1.bf16.xpose.msra.mxu0 0
    %125 = vmatprep.subr.bf16.mxu0 0
    %126 = vmatpush1.bf16.xpose.msra.mxu0 0
    %127 = vmatprep.subr.bf16.mxu0 0
    %128 = vmatpush1.bf16.xpose.msra.mxu0 0
    %129 = vmatprep.mubr.bf16.mxu0 0
    %130 = vmatmul.mubr.bf16.gmra.mrb[0].mxu0 %v92
    %v131 = vpop.f32.mrb[0].mxu0
    %v132 = vadd.f32 0.0, %v131
    %v133 = vpop.f32.mrb[0].mxu0
    %v134 = vpop.f32.mrb[0].mxu0
    %v135 = vpop.f32.mrb[0].mxu0
    %136 = vdwg.mxu0
    %v137 = vmul.f32 %v132, 0.17677669
    %vm138 = vcmask 64512
    %v139 = vsel %vm138, %v137, -inf
    %140 = vmax.xlane.f32.xlu0 %v139
    %v141 = vpop.xlane.xlu0 %140
    %v142 = vsub.f32 %v137, %v141
    %v143 = vmul.f32 %v142, 1.442695
    %v144 = vpow.pop %v143
    %v145 = vsel %vm138, %v144, 0.0
    %146 = vadd.xlane.f32.xlu0 %v145
    %v147 = vpop.xlane.xlu0 %146
    %v148 = vrcp.pop %v147
    %v149 = vmul.f32 %v144, %v148
    %v150 = vpack.c.bf16 %v149, %v149
    %v152 = vsel %vm138, %v150, 0
    %vm154 = vcmask 1043456
    %v156 = vsel %vm154, %v89, 0
    %158 = vmatprep.subr.bf16.mxu0 0
    %159 = vmatpush1.bf16.msra.mxu0 %v156
    %160 = vmatprep.subr.bf16.mxu0 0
    %161 = vmatpush1.bf16.msra.mxu0 0
    %162 = vmatprep.subr.bf16.mxu0 0
    %163 = vmatpush1.bf16.msra.mxu0 0
    %164 = vmatprep.subr.bf16.mxu0 0
    %165 = vmatpush1.bf16.msra.mxu0 0
    %166 = vmatprep.subr.bf16.mxu0 0
    %167 = vmatpush1.bf16.msra.mxu0 0
    %168 = vmatprep.subr.bf16.mxu0 0
    %169 = vmatpush1.bf16.msra.mxu0 0
    %170 = vmatprep.subr.bf16.mxu0 0
    %171 = vmatpush1.bf16.msra.mxu0 0
    %172 = vmatprep.subr.bf16.mxu0 0
    %173 = vmatpush1.bf16.msra.mxu0 0
    %174 = vmatprep.subr.bf16.mxu0 0
    %175 = vmatpush1.bf16.msra.mxu0 0
    %176 = vmatprep.subr.bf16.mxu0 0
    %177 = vmatpush1.bf16.msra.mxu0 0
    %178 = vmatprep.subr.bf16.mxu0 0
    %179 = vmatpush1.bf16.msra.mxu0 0
    %180 = vmatprep.subr.bf16.mxu0 0
    %181 = vmatpush1.bf16.msra.mxu0 0
    %182 = vmatprep.subr.bf16.mxu0 0
    %183 = vmatpush1.bf16.msra.mxu0 0
    %184 = vmatprep.subr.bf16.mxu0 0
    %185 = vmatpush1.bf16.msra.mxu0 0
    %186 = vmatprep.subr.bf16.mxu0 0
    %187 = vmatpush1.bf16.msra.mxu0 0
    %188 = vmatprep.subr.bf16.mxu0 0
    %189 = vmatpush1.bf16.msra.mxu0 0
    %190 = vmatprep.mubr.bf16.mxu0 0
    %191 = vmatmul.mubr.bf16.gmra.mrb[0].mxu0 %v152
    %v192 = vpop.f32.mrb[0].mxu0
    %v193 = vadd.f32 0.0, %v192
    %v194 = vpop.f32.mrb[0].mxu0
    %v195 = vpop.f32.mrb[0].mxu0
    %v196 = vpop.f32.mrb[0].mxu0
    %197 = vdwg.mxu0
    %v198 = vpack.c.bf16 %v193, %v193
    %v200 = vlaneseq
    %v201 = vshrl.u32 %v200, 7
    %v202 = vsub.s32 0, %v201
    %v203 = vrot.slane %v83, %v202
    %v206 = vsel %vm90, %v198, 0
    %208 = vmatprep.subr.bf16.mxu0 0
    %209 = vmatpush1.bf16.msra.mxu0 %v81
    %210 = vmatprep.subr.bf16.mxu0 0
    %211 = vmatpush1.bf16.msra.mxu0 %v82
    %212 = vmatprep.subr.bf16.mxu0 0
    %213 = vmatpush1.bf16.msra.mxu0 0
    %214 = vmatprep.subr.bf16.mxu0 0
    %215 = vmatpush1.bf16.msra.mxu0 0
    %216 = vmatprep.subr.bf16.mxu0 0
    %217 = vmatpush1.bf16.msra.mxu0 0
    %218 = vmatprep.subr.bf16.mxu0 0
    %219 = vmatpush1.bf16.msra.mxu0 0
    %220 = vmatprep.subr.bf16.mxu0 0
    %221 = vmatpush1.bf16.msra.mxu0 0
    %222 = vmatprep.subr.bf16.mxu0 0
    %223 = vmatpush1.bf16.msra.mxu0 0
    %224 = vmatprep.subr.bf16.mxu0 0
    %225 = vmatpush1.bf16.msra.mxu0 0
    %226 = vmatprep.subr.bf16.mxu0 0
    %227 = vmatpush1.bf16.msra.mxu0 0
    %228 = vmatprep.subr.bf16.mxu0 0
    %229 = vmatpush1.bf16.msra.mxu0 0
    %230 = vmatprep.subr.bf16.mxu0 0
    %231 = vmatpush1.bf16.msra.mxu0 0
    %232 = vmatprep.subr.bf16.mxu0 0
    %233 = vmatpush1.bf16.msra.mxu0 0
    %234 = vmatprep.subr.bf16.mxu0 0
    %235 = vmatpush1.bf16.msra.mxu0 0
    %236 = vmatprep.subr.bf16.mxu0 0
    %237 = vmatpush1.bf16.msra.mxu0 0
    %238 = vmatprep.subr.bf16.mxu0 0
    %239 = vmatpush1.bf16.msra.mxu0 0
    %240 = vmatprep.mubr.bf16.mxu0 0
    %241 = vmatmul.mubr.bf16.gmra.mrb[0].mxu0 %v206
    %v242 = vpop.f32.mrb[0].mxu0
    %v243 = vadd.f32 %v203, %v242
    %v244 = vpop.f32.mrb[0].mxu0
    %v245 = vpop.f32.mrb[0].mxu0
    %v246 = vpop.f32.mrb[0].mxu0
    %247 = vdwg.mxu0
    %248 = vst [vmem:[#allocation10] sm:$0xff] %v243
    %s249 = scalar_lea.vmem [#allocation2], 8
    %v250 = vld [vmem:[%s249] sm:$0xff]
    %v251 = vpack.c.bf16 %v250, %v250
    %s252 = scalar_lea.vmem [#allocation5], 8
    %v253 = vld [vmem:[%s252] sm:$0xff]
    %v254 = vpack.c.bf16 %v253, %v253
    %s255 = scalar_lea.vmem [#allocation7], 8
    %v256 = vld [vmem:[%s255] sm:$0xff]
    %v257 = vpack.c.bf16 %v256, %v256
    %v259 = vsel %vm90, %v251, 0
    %v262 = vsel %vm90, %v254, 0
    %264 = vmatprep.subr.bf16.mxu0 0
    %265 = vmatpush1.bf16.xpose.msra.mxu0 %v262
    %266 = vmatprep.subr.bf16.mxu0 0
    %267 = vmatpush1.bf16.xpose.msra.mxu0 0
    %268 = vmatprep.subr.bf16.mxu0 0
    %269 = vmatpush1.bf16.xpose.msra.mxu0 0
    %270 = vmatprep.subr.bf16.mxu0 0
    %271 = vmatpush1.bf16.xpose.msra.mxu0 0
    %272 = vmatprep.subr.bf16.mxu0 0
    %273 = vmatpush1.bf16.xpose.msra.mxu0 0
    %274 = vmatprep.subr.bf16.mxu0 0
    %275 = vmatpush1.bf16.xpose.msra.mxu0 0
    %276 = vmatprep.subr.bf16.mxu0 0
    %277 = vmatpush1.bf16.xpose.msra.mxu0 0
    %278 = vmatprep.subr.bf16.mxu0 0
    %279 = vmatpush1.bf16.xpose.msra.mxu0 0
    %280 = vmatprep.subr.bf16.mxu0 0
    %281 = vmatpush1.bf16.xpose.msra.mxu0 0
    %282 = vmatprep.subr.bf16.mxu0 0
    %283 = vmatpush1.bf16.xpose.msra.mxu0 0
    %284 = vmatprep.subr.bf16.mxu0 0
    %285 = vmatpush1.bf16.xpose.msra.mxu0 0
    %286 = vmatprep.subr.bf16.mxu0 0
    %287 = vmatpush1.bf16.xpose.msra.mxu0 0
    %288 = vmatprep.subr.bf16.mxu0 0
    %289 = vmatpush1.bf16.xpose.msra.mxu0 0
    %290 = vmatprep.subr.bf16.mxu0 0
    %291 = vmatpush1.bf16.xpose.msra.mxu0 0
    %292 = vmatprep.subr.bf16.mxu0 0
    %293 = vmatpush1.bf16.xpose.msra.mxu0 0
    %294 = vmatprep.subr.bf16.mxu0 0
    %295 = vmatpush1.bf16.xpose.msra.mxu0 0
    %296 = vmatprep.mubr.bf16.mxu0 0
    %297 = vmatmul.mubr.bf16.gmra.mrb[0].mxu0 %v259
    %v298 = vpop.f32.mrb[0].mxu0
    %v299 = vadd.f32 0.0, %v298
    %v300 = vpop.f32.mrb[0].mxu0
    %v301 = vpop.f32.mrb[0].mxu0
    %v302 = vpop.f32.mrb[0].mxu0
    %303 = vdwg.mxu0
    %v304 = vmul.f32 %v299, 0.17677669
    %v305 = vsel %vm138, %v304, -inf
    %306 = vmax.xlane.f32.xlu0 %v305
    %v307 = vpop.xlane.xlu0 %306
    %v308 = vsub.f32 %v304, %v307
    %v309 = vmul.f32 %v308, 1.442695
    %v310 = vpow.pop %v309
    %v311 = vsel %vm138, %v310, 0.0
    %312 = vadd.xlane.f32.xlu0 %v311
    %v313 = vpop.xlane.xlu0 %312
    %v314 = vrcp.pop %v313
    %v315 = vmul.f32 %v310, %v314
    %v316 = vpack.c.bf16 %v315, %v315
    %v318 = vsel %vm138, %v316, 0
    %v321 = vsel %vm154, %v257, 0
    %323 = vmatprep.subr.bf16.mxu0 0
    %324 = vmatpush1.bf16.msra.mxu0 %v321
    %325 = vmatprep.subr.bf16.mxu0 0
    %326 = vmatpush1.bf16.msra.mxu0 0
    %327 = vmatprep.subr.bf16.mxu0 0
    %328 = vmatpush1.bf16.msra.mxu0 0
    %329 = vmatprep.subr.bf16.mxu0 0
    %330 = vmatpush1.bf16.msra.mxu0 0
    %331 = vmatprep.subr.bf16.mxu0 0
    %332 = vmatpush1.bf16.msra.mxu0 0
    %333 = vmatprep.subr.bf16.mxu0 0
    %334 = vmatpush1.bf16.msra.mxu0 0
    %335 = vmatprep.subr.bf16.mxu0 0
    %336 = vmatpush1.bf16.msra.mxu0 0
    %337 = vmatprep.subr.bf16.mxu0 0
    %338 = vmatpush1.bf16.msra.mxu0 0
    %339 = vmatprep.subr.bf16.mxu0 0
    %340 = vmatpush1.bf16.msra.mxu0 0
    %341 = vmatprep.subr.bf16.mxu0 0
    %342 = vmatpush1.bf16.msra.mxu0 0
    %343 = vmatprep.subr.bf16.mxu0 0
    %344 = vmatpush1.bf16.msra.mxu0 0
    %345 = vmatprep.subr.bf16.mxu0 0
    %346 = vmatpush1.bf16.msra.mxu0 0
    %347 = vmatprep.subr.bf16.mxu0 0
    %348 = vmatpush1.bf16.msra.mxu0 0
    %349 = vmatprep.subr.bf16.mxu0 0
    %350 = vmatpush1.bf16.msra.mxu0 0
    %351 = vmatprep.subr.bf16.mxu0 0
    %352 = vmatpush1.bf16.msra.mxu0 0
    %353 = vmatprep.subr.bf16.mxu0 0
    %354 = vmatpush1.bf16.msra.mxu0 0
    %355 = vmatprep.mubr.bf16.mxu0 0
    %356 = vmatmul.mubr.bf16.gmra.mrb[0].mxu0 %v318
    %v357 = vpop.f32.mrb[0].mxu0
    %v358 = vadd.f32 0.0, %v357
    %v359 = vpop.f32.mrb[0].mxu0
    %v360 = vpop.f32.mrb[0].mxu0
    %v361 = vpop.f32.mrb[0].mxu0
    %362 = vdwg.mxu0
    %v363 = vpack.c.bf16 %v358, %v358
    %v365 = vsel %vm90, %v363, 0
    %367 = vmatprep.subr.bf16.mxu0 0
    %368 = vmatpush1.bf16.msra.mxu0 %v81
    %369 = vmatprep.subr.bf16.mxu0 0
    %370 = vmatpush1.bf16.msra.mxu0 %v82
    %371 = vmatprep.subr.bf16.mxu0 0
    %372 = vmatpush1.bf16.msra.mxu0 0
    %373 = vmatprep.subr.bf16.mxu0 0
    %374 = vmatpush1.bf16.msra.mxu0 0
    %375 = vmatprep.subr.bf16.mxu0 0
    %376 = vmatpush1.bf16.msra.mxu0 0
    %377 = vmatprep.subr.bf16.mxu0 0
    %378 = vmatpush1.bf16.msra.mxu0 0
    %379 = vmatprep.subr.bf16.mxu0 0
    %380 = vmatpush1.bf16.msra.mxu0 0
    %381 = vmatprep.subr.bf16.mxu0 0
    %382 = vmatpush1.bf16.msra.mxu0 0
    %383 = vmatprep.subr.bf16.mxu0 0
    %384 = vmatpush1.bf16.msra.mxu0 0
    %385 = vmatprep.subr.bf16.mxu0 0
    %386 = vmatpush1.bf16.msra.mxu0 0
    %387 = vmatprep.subr.bf16.mxu0 0
    %388 = vmatpush1.bf16.msra.mxu0 0
    %389 = vmatprep.subr.bf16.mxu0 0
    %390 = vmatpush1.bf16.msra.mxu0 0
    %391 = vmatprep.subr.bf16.mxu0 0
    %392 = vmatpush1.bf16.msra.mxu0 0
    %393 = vmatprep.subr.bf16.mxu0 0
    %394 = vmatpush1.bf16.msra.mxu0 0
    %395 = vmatprep.subr.bf16.mxu0 0
    %396 = vmatpush1.bf16.msra.mxu0 0
    %397 = vmatprep.subr.bf16.mxu0 0
    %398 = vmatpush1.bf16.msra.mxu0 0
    %399 = vmatprep.mubr.bf16.mxu0 0
    %400 = vmatmul.mubr.bf16.gmra.mrb[0].mxu0 %v365
    %v401 = vpop.f32.mrb[0].mxu0
    %v402 = vadd.f32 %v203, %v401
    %v403 = vpop.f32.mrb[0].mxu0
    %v404 = vpop.f32.mrb[0].mxu0
    %v405 = vpop.f32.mrb[0].mxu0
    %406 = vdwg.mxu0
    %s407 = scalar_lea.vmem [#allocation10], 8
    %408 = vst [vmem:[%s407] sm:$0xff] %v402
    // Predicated region
    $region38: #{_forward_impl.1} parent=1 // pred_check
      _
    $region39: #{_forward_impl.1} parent=1 // pred_check_branch
      %410 = sbr.rel (0) target = $region41
    $region40: #{_forward_impl.1} parent=1 // pred_region
      %s412 = ssub.s32 256, 256
      %413 = vsyncadd [#allocation4], %s412
      %s414 = sshll.u32 [#allocation10], 4
      %s415 = int_to_ptr.vmem [resolvable:$true] %s414
      %420 = dma.vmem_to_hbm [thread:$0]  %s415, 256, %s5, [#allocation4], 128, 128, 8
    $region41: #{_forward_impl.1} parent=1 // pred_fallthru
      _
    // Predicated region
    $region42: #{_forward_impl.1} parent=1 // pred_check
      _
    $region43: #{_forward_impl.1} parent=1 // pred_check_branch
      %422 = sbr.rel (0) target = $region45
    $region44: #{_forward_impl.1} parent=1 // pred_region
      %423 = dma.done [#allocation4], 256
    $region45: #{_forward_impl.1} parent=1 // pred_fallthru
      _
    %424 = vsyncpa [#allocation3], 1
    %425 = vsyncpa [#allocation6], 1
    %426 = vsyncpa [#allocation9], 1
    %427 = vsyncpa [#allocation4], 1

</llo_original>
